<compile_context>
chip_gen: v5e
topology: v5e:2x2
jax: 0.10.0
libtpu: 0.0.40
codegen_flags: <defaults>
</compile_context>

<pallas_src>
import functools

import jax
import jax.numpy as jnp
from jax.experimental import pallas as pl
from jax.experimental.pallas import tpu as pltpu

LANES = 128            # TPU lane width (minor dim)
SUBLANES = 8           # f32 sublane count
GROUP = 8              # independent accumulator chains per tile
MAX_TILE_ROWS = 4096   # 4096 x 128 x 4 B = 2 MiB per f32 input block


def _focal_partial_kernel(logits_ref, targets_ref, out_ref, *,
                          gamma, alpha, label_smoothing, n_valid,
                          tiles_per_split, tile_rows):
    outer = pl.program_id(0)   # TensorCore split ("parallel")
    inner = pl.program_id(1)   # reduction over row tiles ("arbitrary")

    # Zero the resident output/accumulator block at the start of each split.
    @pl.when(inner == 0)
    def _():
        out_ref[...] = jnp.zeros_like(out_ref)

    # Inputs arrive in caller-native dtype; cast to f32 on the VPU.
    x = logits_ref[...].astype(jnp.float32)
    t = targets_ref[...].astype(jnp.float32)

    # Label smoothing (f32).
    t = t * (1.0 - label_smoothing) + 0.5 * label_smoothing

    # Numerically-stable BCE with logits (matches F.binary_cross_entropy_with_logits):
    #   bce = max(x, 0) - x * t + log1p(exp(-|x|))
    bce = jnp.maximum(x, 0.0) - x * t + jnp.log1p(jnp.exp(-jnp.abs(x)))

    pt = jnp.minimum(jnp.exp(-bce), 1.0)
    one_minus_pt = 1.0 - pt

    # Focal modulation (1 - pt)^gamma.  Cheap gammas avoid the extra EUP ops
    # (relevant on v7x, where the generic path is otherwise EUP-bound); they
    # also avoid the gamma == 0 NaN at pt == 1.
    if gamma == 0.0:
        focal = None
    elif gamma == 1.0:
        focal = one_minus_pt
    elif gamma == 2.0:
        focal = one_minus_pt * one_minus_pt
    elif gamma == 0.5:
        focal = jnp.sqrt(one_minus_pt)
    else:
        # For gamma > 0, pt == 1 gives exp(-inf) == 0, matching power(0, gamma).
        focal = jnp.exp(gamma * jnp.log1p(-pt))

    alpha_t = t * alpha + (1.0 - t) * (1.0 - alpha)
    loss = alpha_t * bce if focal is None else alpha_t * focal * bce

    tile_elems = tile_rows * LANES
    tile_idx = outer * tiles_per_split + inner      # logical (unclamped) tile
    elem_off = tile_idx * tile_elems

    def _accumulate(vals):
        # Reduce (tile_rows, 128) -> (8, 128) on the VPU and add into the
        # resident block.  Use GROUP independent (8,128) chains when the tile
        # is tall enough so the reduction is not one long carried vadd chain.
        if tile_rows % (GROUP * SUBLANES) == 0:
            p = jnp.sum(vals.reshape(-1, GROUP, SUBLANES, LANES), axis=0)
            out_ref[0, :, :] += jnp.sum(p, axis=0)
        elif tile_rows % SUBLANES == 0:
            out_ref[0, :, :] += jnp.sum(
                vals.reshape(-1, SUBLANES, LANES), axis=0)
        else:
            # Tiny / ragged tile (only when the whole array has < row_align rows).
            full = (tile_rows // SUBLANES) * SUBLANES
            if full:
                out_ref[0, :, :] += jnp.sum(
                    vals[:full].reshape(-1, SUBLANES, LANES), axis=0)
            rem = tile_rows - full
            if rem:
                out_ref[0, 0:rem, :] += vals[full:, :]

    # Interior tiles: every element is valid, no mask work at all.
    @pl.when(elem_off + tile_elems <= n_valid)
    def _():
        _accumulate(loss)

    # Boundary / phantom / padded tiles: synthesize the validity mask in-kernel.
    # Must be a select (jnp.where), not a multiply, so unspecified/NaN data in
    # invalid lanes cannot leak.
    @pl.when(elem_off + tile_elems > n_valid)
    def _():
        row = jax.lax.broadcasted_iota(jnp.int32, (tile_rows, LANES), 0)
        lane = jax.lax.broadcasted_iota(jnp.int32, (tile_rows, LANES), 1)
        elem = elem_off + row * LANES + lane
        _accumulate(jnp.where(elem < n_valid, loss, 0.0))


def _num_tensorcores():
    """Best-effort TensorCores-per-chip; falls back to 2 (safe everywhere)."""
    try:
        info = pltpu.get_tpu_info()
        for name in ("num_cores", "core_count", "num_tensorcores",
                     "tensor_cores_per_chip", "cores_per_chip"):
            v = getattr(info, name, None)
            if v:
                return int(v)
    except Exception:
        pass
    try:
        v = getattr(jax.devices()[0], "num_cores", None)
        if v:
            return int(v)
    except Exception:
        pass
    return 2   # size-2 "parallel" axis is harmless (just sequential) on 1-TC chips


def binary_focal_loss(logits, targets, *, gamma=0.1, alpha=0.5,
                      label_smoothing=0.1, max_tile_rows=MAX_TILE_ROWS):
    """Mean binary focal loss over all elements (use_logits=True path)."""
    assert logits.shape == targets.shape
    n = int(logits.size)

    # Sublane alignment demanded by the widest-packed input dtype
    # (f32 -> 8 rows, bf16 -> 16, 8-bit -> 32).
    row_align = max(SUBLANES,
                    32 // jnp.dtype(logits.dtype).itemsize,
                    32 // jnp.dtype(targets.dtype).itemsize)

    if n % LANES == 0:
        # Free bitcast reshape: no extra HBM pass, no dtype change.
        rows = n // LANES
        l2d = jnp.reshape(logits, (rows, LANES))
        t2d = jnp.reshape(targets, (rows, LANES))
    else:
        # TODO(synk): non-128-aligned sizes still pay one pad copy; a 1-D
        # BlockSpec + in-kernel reshape would remove it.
        pad = LANES - n % LANES
        rows = (n + pad) // LANES
        l2d = jnp.pad(jnp.ravel(logits), (0, pad)).reshape(rows, LANES)
        t2d = jnp.pad(jnp.ravel(targets), (0, pad)).reshape(rows, LANES)

    # Tile height: as big as comfortably fits VMEM (closer to HBM roofline,
    # fewer per-step overheads).  Must be a multiple of row_align unless it
    # spans all rows.
    if rows <= row_align:
        tile_rows = rows
    elif rows <= max_tile_rows and rows % row_align == 0:
        tile_rows = rows
    else:
        tile_rows = min(max_tile_rows, (rows // row_align) * row_align)

    num_tiles = pl.cdiv(rows, tile_rows)

    # Leading "parallel" axis: always 2-way on 2-TC chips (v7x) when there are
    # at least 2 tiles; odd tile counts get one masked phantom tile instead of
    # serializing onto one core.  1 split on single-TC chips.
    num_splits = 2 if (num_tiles >= 2 and _num_tensorcores() >= 2) else 1
    tiles_per_split = pl.cdiv(num_tiles, num_splits)
    last_tile = num_tiles - 1

    def in_index_map(s, i):
        # Clamp so a phantom tile never yields an out-of-range block index; its
        # contribution is zeroed by the in-kernel element mask.
        return (jnp.minimum(s * tiles_per_split + i, last_tile), 0)

    kernel = functools.partial(
        _focal_partial_kernel,
        gamma=float(gamma), alpha=float(alpha),
        label_smoothing=float(label_smoothing),
        n_valid=n, tiles_per_split=tiles_per_split, tile_rows=tile_rows)

    bytes_accessed = (n * (jnp.dtype(logits.dtype).itemsize
                           + jnp.dtype(targets.dtype).itemsize)
                      + num_splits * SUBLANES * LANES * 4)

    partials = pl.pallas_call(
        kernel,
        out_shape=jax.ShapeDtypeStruct((num_splits, SUBLANES, LANES),
                                       jnp.float32),
        grid_spec=pltpu.PrefetchScalarGridSpec(
            num_scalar_prefetch=0,
            grid=(num_splits, tiles_per_split),
            in_specs=[
                pl.BlockSpec((tile_rows, LANES), in_index_map),
                pl.BlockSpec((tile_rows, LANES), in_index_map),
            ],
            out_specs=pl.BlockSpec((1, SUBLANES, LANES),
                                   lambda s, i: (s, 0, 0)),
        ),
        compiler_params=pltpu.CompilerParams(
            dimension_semantics=("parallel", "arbitrary"),
            vmem_limit_bytes=48 * 1024 * 1024),
        cost_estimate=pl.CostEstimate(
            flops=18 * n,
            transcendentals=5 * n,
            bytes_accessed=int(bytes_accessed)),
    )(l2d, t2d)

    # Tiny final cross-lane/sublane reduction + mean in the wrapper.
    return jnp.sum(partials) / jnp.float32(n)


def binary_focal_loss_ref(logits, targets, *, gamma=0.1, alpha=0.5,
                          label_smoothing=0.1):
    """Pure-JAX reference of the PyTorch module's forward (use_logits=True)."""
    x = logits.astype(jnp.float32)
    t = targets.astype(jnp.float32)
    t = t * (1.0 - label_smoothing) + 0.5 * label_smoothing
    bce = jnp.maximum(x, 0.0) - x * t + jnp.log1p(jnp.exp(-jnp.abs(x)))
    pt = jnp.exp(-bce)
    alpha_t = t * alpha + (1.0 - t) * (1.0 - alpha)
    focal_term = jnp.power(jnp.maximum(1.0 - pt, 0.0), gamma)
    loss = alpha_t * focal_term * bce
    return jnp.mean(loss)


if __name__ == "__main__":
    key = jax.random.PRNGKey(0)
    k1, k2 = jax.random.split(key)
    # Small, NCHW-like shape: batch=2, channels=4, spatial=16x16.
    shape = (2, 4, 16, 16)
    logits = jax.random.normal(k1, shape, dtype=jnp.float32) * 2.0
    targets = (jax.random.uniform(k2, shape) > 0.5).astype(jnp.float32)

    out = binary_focal_loss(logits, targets)
    out = jax.block_until_ready(out)

    ref = binary_focal_loss_ref(logits, targets)
    assert jnp.allclose(out, ref, rtol=1e-5, atol=1e-6), (out, ref)
    print("KERNEL_OK")
</pallas_src>

<mosaic_0001>
module attributes {stable_mosaic.version = 11 : i64} {
  func.func @_focal_partial_kernel(%arg0: i32, %arg1: i32, %arg2: memref<16x128xf32, #tpu.memory_space<vmem>>, %arg3: memref<16x128xf32, #tpu.memory_space<vmem>>, %arg4: memref<1x8x128xf32, #tpu.memory_space<vmem>>) attributes {dimension_semantics = [#tpu.dimension_semantics<parallel>, #tpu.dimension_semantics<arbitrary>], iteration_bounds = array<i64: 1, 1>, scalar_prefetch = 0 : i64, scratch_operands = 0 : i64, tpu.core_type = #tpu.core_type<tc>, window_params = [{transform_indices = @transform_0, window_bounds = array<i64: 16, 128>}, {transform_indices = @transform_1, window_bounds = array<i64: 16, 128>}, {transform_indices = @transform_2, window_bounds = array<i64: 1, 8, 128>}]} {
    %c0_i32 = arith.constant 0 : i32
    %0 = arith.cmpi eq, %arg1, %c0_i32 : i32
    %1 = arith.extui %0 : i1 to i32
    %c0_i32_0 = arith.constant 0 : i32
    %2 = arith.cmpi ne, %1, %c0_i32_0 : i32
    scf.if %2 {
      %cst_20 = arith.constant 0.000000e+00 : f32
      %50 = vector.broadcast %cst_20 : f32 to vector<1x8x128xf32>
      %c0_21 = arith.constant 0 : index
      %c0_22 = arith.constant 0 : index
      %c0_23 = arith.constant 0 : index
      %51 = vector.load %arg4[%c0_21, %c0_22, %c0_23] : memref<1x8x128xf32, #tpu.memory_space<vmem>>, vector<1x8x128xf32>
      tpu.vector_store %arg4[%c0_21, %c0_22, %c0_23], %50 {strides = array<i32>} : memref<1x8x128xf32, #tpu.memory_space<vmem>>, vector<1x8x128xf32>,
    } else {
    }
    %c0 = arith.constant 0 : index
    %c0_1 = arith.constant 0 : index
    %3 = vector.load %arg2[%c0, %c0_1] : memref<16x128xf32, #tpu.memory_space<vmem>>, vector<16x128xf32>
    %c0_2 = arith.constant 0 : index
    %c0_3 = arith.constant 0 : index
    %4 = vector.load %arg3[%c0_2, %c0_3] : memref<16x128xf32, #tpu.memory_space<vmem>>, vector<16x128xf32>
    %cst = arith.constant 0.899999976 : f32
    %5 = vector.broadcast %cst : f32 to vector<16x128xf32>
    %6 = arith.mulf %4, %5 : vector<16x128xf32>
    %cst_4 = arith.constant 5.000000e-02 : f32
    %7 = vector.broadcast %cst_4 : f32 to vector<16x128xf32>
    %8 = arith.addf %6, %7 : vector<16x128xf32>
    %cst_5 = arith.constant 0.000000e+00 : f32
    %9 = vector.broadcast %cst_5 : f32 to vector<16x128xf32>
    %10 = arith.maximumf %3, %9 : vector<16x128xf32>
    %11 = arith.mulf %3, %8 : vector<16x128xf32>
    %12 = arith.subf %10, %11 : vector<16x128xf32>
    %13 = math.absf %3 : vector<16x128xf32>
    %cst_6 = arith.constant 0.000000e+00 : f32
    %14 = vector.broadcast %cst_6 : f32 to vector<16x128xf32>
    %15 = arith.subf %14, %13 : vector<16x128xf32>
    %16 = math.exp %15 : vector<16x128xf32>
    %17 = math.log1p %16 : vector<16x128xf32>
    %18 = arith.addf %12, %17 : vector<16x128xf32>
    %cst_7 = arith.constant 0.000000e+00 : f32
    %19 = vector.broadcast %cst_7 : f32 to vector<16x128xf32>
    %20 = arith.subf %19, %18 : vector<16x128xf32>
    %21 = math.exp %20 : vector<16x128xf32>
    %cst_8 = arith.constant 1.000000e+00 : f32
    %22 = vector.broadcast %cst_8 : f32 to vector<16x128xf32>
    %23 = arith.minimumf %21, %22 : vector<16x128xf32>
    %cst_9 = arith.constant 0.000000e+00 : f32
    %24 = vector.broadcast %cst_9 : f32 to vector<16x128xf32>
    %25 = arith.subf %24, %23 : vector<16x128xf32>
    %26 = math.log1p %25 : vector<16x128xf32>
    %cst_10 = arith.constant 1.000000e-01 : f32
    %27 = vector.broadcast %cst_10 : f32 to vector<16x128xf32>
    %28 = arith.mulf %27, %26 : vector<16x128xf32>
    %29 = math.exp %28 : vector<16x128xf32>
    %cst_11 = arith.constant 5.000000e-01 : f32
    %30 = vector.broadcast %cst_11 : f32 to vector<16x128xf32>
    %31 = arith.mulf %8, %30 : vector<16x128xf32>
    %cst_12 = arith.constant 1.000000e+00 : f32
    %32 = vector.broadcast %cst_12 : f32 to vector<16x128xf32>
    %33 = arith.subf %32, %8 : vector<16x128xf32>
    %cst_13 = arith.constant 5.000000e-01 : f32
    %34 = vector.broadcast %cst_13 : f32 to vector<16x128xf32>
    %35 = arith.mulf %33, %34 : vector<16x128xf32>
    %36 = arith.addf %31, %35 : vector<16x128xf32>
    %37 = arith.mulf %36, %29 : vector<16x128xf32>
    %38 = arith.mulf %37, %18 : vector<16x128xf32>
    %c1_i32 = arith.constant 1 : i32
    %39 = arith.muli %arg0, %c1_i32 : i32
    %40 = arith.addi %39, %arg1 : i32
    %c2048_i32 = arith.constant 2048 : i32
    %41 = arith.muli %40, %c2048_i32 : i32
    %c2048_i32_14 = arith.constant 2048 : i32
    %42 = arith.addi %41, %c2048_i32_14 : i32
    %c2048_i32_15 = arith.constant 2048 : i32
    %43 = arith.cmpi sle, %42, %c2048_i32_15 : i32
    %44 = arith.extui %43 : i1 to i32
    %c0_i32_16 = arith.constant 0 : i32
    %45 = arith.cmpi ne, %44, %c0_i32_16 : i32
    scf.if %45 {
      %c0_20 = arith.constant 0 : index
      %c0_21 = arith.constant 0 : index
      %c0_22 = arith.constant 0 : index
      %50 = vector.load %arg4[%c0_20, %c0_21, %c0_22] : memref<1x8x128xf32, #tpu.memory_space<vmem>>, vector<1x8x128xf32>
      %51 = vector.shape_cast %50 : vector<1x8x128xf32> to vector<8x128xf32>
      %52 = vector.shape_cast %38 : vector<16x128xf32> to vector<2x8x128xf32>
      %cst_23 = arith.constant dense<0.000000e+00> : vector<8x128xf32>
      %53 = vector.multi_reduction <add>, %52, %cst_23 [0] : vector<2x8x128xf32> to vector<8x128xf32>
      %54 = arith.addf %51, %53 : vector<8x128xf32>
      %c0_24 = arith.constant 0 : index
      %c0_25 = arith.constant 0 : index
      %c0_26 = arith.constant 0 : index
      %55 = vector.load %arg4[%c0_24, %c0_25, %c0_26] : memref<1x8x128xf32, #tpu.memory_space<vmem>>, vector<1x8x128xf32>
      %56 = vector.shape_cast %55 : vector<1x8x128xf32> to vector<8x128xf32>
      %57 = vector.shape_cast %54 : vector<8x128xf32> to vector<1x8x128xf32>
      tpu.vector_store %arg4[%c0_24, %c0_25, %c0_26], %57 {strides = array<i32>} : memref<1x8x128xf32, #tpu.memory_space<vmem>>, vector<1x8x128xf32>,
    } else {
    }
    %c2048_i32_17 = arith.constant 2048 : i32
    %46 = arith.addi %41, %c2048_i32_17 : i32
    %c2048_i32_18 = arith.constant 2048 : i32
    %47 = arith.cmpi sgt, %46, %c2048_i32_18 : i32
    %48 = arith.extui %47 : i1 to i32
    %c0_i32_19 = arith.constant 0 : i32
    %49 = arith.cmpi ne, %48, %c0_i32_19 : i32
    scf.if %49 {
      %50 = tpu.iota {dimensions = array<i32: 0>} : vector<16x128xi32>
      %51 = tpu.iota {dimensions = array<i32: 1>} : vector<16x128xi32>
      %c128_i32 = arith.constant 128 : i32
      %52 = vector.broadcast %c128_i32 : i32 to vector<16x128xi32>
      %53 = arith.muli %50, %52 : vector<16x128xi32>
      %54 = vector.broadcast %41 : i32 to vector<16x128xi32>
      %55 = arith.addi %54, %53 : vector<16x128xi32>
      %56 = arith.addi %55, %51 : vector<16x128xi32>
      %c2048_i32_20 = arith.constant 2048 : i32
      %57 = vector.broadcast %c2048_i32_20 : i32 to vector<16x128xi32>
      %58 = arith.cmpi slt, %56, %57 : vector<16x128xi32>
      %cst_21 = arith.constant 0.000000e+00 : f32
      %59 = vector.broadcast %cst_21 : f32 to vector<16x128xf32>
      %60 = arith.select %58, %38, %59 : vector<16x128xi1>, vector<16x128xf32>
      %c0_22 = arith.constant 0 : index
      %c0_23 = arith.constant 0 : index
      %c0_24 = arith.constant 0 : index
      %61 = vector.load %arg4[%c0_22, %c0_23, %c0_24] : memref<1x8x128xf32, #tpu.memory_space<vmem>>, vector<1x8x128xf32>
      %62 = vector.shape_cast %61 : vector<1x8x128xf32> to vector<8x128xf32>
      %63 = vector.shape_cast %60 : vector<16x128xf32> to vector<2x8x128xf32>
      %cst_25 = arith.constant dense<0.000000e+00> : vector<8x128xf32>
      %64 = vector.multi_reduction <add>, %63, %cst_25 [0] : vector<2x8x128xf32> to vector<8x128xf32>
      %65 = arith.addf %62, %64 : vector<8x128xf32>
      %c0_26 = arith.constant 0 : index
      %c0_27 = arith.constant 0 : index
      %c0_28 = arith.constant 0 : index
      %66 = vector.load %arg4[%c0_26, %c0_27, %c0_28] : memref<1x8x128xf32, #tpu.memory_space<vmem>>, vector<1x8x128xf32>
      %67 = vector.shape_cast %66 : vector<1x8x128xf32> to vector<8x128xf32>
      %68 = vector.shape_cast %65 : vector<8x128xf32> to vector<1x8x128xf32>
      tpu.vector_store %arg4[%c0_26, %c0_27, %c0_28], %68 {strides = array<i32>} : memref<1x8x128xf32, #tpu.memory_space<vmem>>, vector<1x8x128xf32>,
    } else {
    }
    return
  }
  func.func @transform_0(%arg0: i32, %arg1: i32) -> (i32, i32) {
    %c1_i32 = arith.constant 1 : i32
    %0 = arith.muli %arg0, %c1_i32 : i32
    %1 = arith.addi %0, %arg1 : i32
    %c0_i32 = arith.constant 0 : i32
    %2 = arith.minsi %1, %c0_i32 : i32
    %c0_i32_0 = arith.constant 0 : i32
    %c0_i32_1 = arith.constant 0 : i32
    return %2, %c0_i32_0 : i32, i32
  }
  func.func @transform_1(%arg0: i32, %arg1: i32) -> (i32, i32) {
    %c1_i32 = arith.constant 1 : i32
    %0 = arith.muli %arg0, %c1_i32 : i32
    %1 = arith.addi %0, %arg1 : i32
    %c0_i32 = arith.constant 0 : i32
    %2 = arith.minsi %1, %c0_i32 : i32
    %c0_i32_0 = arith.constant 0 : i32
    %c0_i32_1 = arith.constant 0 : i32
    return %2, %c0_i32_0 : i32, i32
  }
  func.func @transform_2(%arg0: i32, %arg1: i32) -> (i32, i32, i32) {
    %c0_i32 = arith.constant 0 : i32
    %c0_i32_0 = arith.constant 0 : i32
    %c0_i32_1 = arith.constant 0 : i32
    return %arg0, %c0_i32, %c0_i32_0 : i32, i32, i32
  }
}

</mosaic_0001>

<llo_original>
// kernel: tpu_custom_call.1
$region0: #{tpu_custom_call.1}
  #allocation0 [shape = 'u32[]', space=smem, size = 0x4, offset = 0x4, fixed_abs, tag = 'smem constant byte address 0x4 - core index']
  #allocation1 [shape = 'u32[72,128]{1,0:T(1,128)}', space=vmem, size = 0x9000, scoped, tag = 'internal scratch']
  %s0 = inlined_call_operand.hbm [shape: f32[16,128], index: 0, kind: input, shape index: {}]
  %s1 = inlined_call_operand.hbm [shape: f32[16,128], index: 1, kind: input, shape index: {}]
  %s2 = inlined_call_operand.hbm [shape: f32[1,8,128], index: 2, kind: output, shape index: {}]
  %s3 = sld [smem:[#allocation0]]
  $region38: #{tpu_custom_call.1} parent=0
    _
  %s5 = ssub.s32 1, %s3
  %s6 = scalar_select 0, %s5, %s3
  $region1: #{tpu_custom_call.1} parent=0
    #allocation2 [shape = 'u8[8192]{0}', space=vmem, size = 0x2000, scoped, tag = 'input window, operand 0, single buffered']
    #allocation3 [shape = 's32[1]{0}', space=sflag, size = 0x4, scoped, tag = 'scoped memory for tpu_custom_call.1']
    #allocation4 [shape = 's32[1]{0}', space=sflag, size = 0x4, scoped, tag = 'scoped memory for tpu_custom_call.1']
    #allocation5 [shape = 'u8[8192]{0}', space=vmem, size = 0x2000, scoped, tag = 'input window, operand 1, single buffered']
    #allocation6 [shape = 's32[1]{0}', space=sflag, size = 0x4, scoped, tag = 'scoped memory for tpu_custom_call.1']
    #allocation7 [shape = 'u8[4096]{0}', space=vmem, size = 0x1000, scoped, tag = 'output window, operand 0, single buffered']
    %7 = vsyncpa [#allocation3], 0
    %8 = vsyncpa [#allocation6], 0
    %9 = vsyncpa [#allocation4], 0
    // Predicated region
    $region2: #{tpu_custom_call.1} parent=1 // pred_check
      _
    $region3: #{tpu_custom_call.1} parent=1 // pred_check_branch
      %11 = sbr.rel (0) target = $region5
    $region4: #{tpu_custom_call.1} parent=1 // pred_region
      %s12 = sadd.s32 0, 0
      %p13 = scmp.lt.s32.totalorder %s12, 0
      %s14 = scalar_select %p13, %s12, 0
      %s15 = smul.u32 2, %s14
      %17 = vsyncadd [#allocation3], 0
      %s18 = smul.addr %s15, 8
      %s19 = scalar_lea.hbm %s0, %s18
      %s20 = sshll.u32 %s19, 4
      %s21 = int_to_ptr.hbm [resolvable:$true] %s20
      %s22 = sshll.u32 [#allocation2], 4
      %s23 = int_to_ptr.vmem [resolvable:$true] %s22
      %28 = dma.hbm_to_vmem [thread:$0]  %s21, 256, %s23, [#allocation3], 128, 128, 8
    $region5: #{tpu_custom_call.1} parent=1 // pred_fallthru
      _
    // Predicated region
    $region6: #{tpu_custom_call.1} parent=1 // pred_check
      _
    $region7: #{tpu_custom_call.1} parent=1 // pred_check_branch
      %30 = sbr.rel (0) target = $region9
    $region8: #{tpu_custom_call.1} parent=1 // pred_region
      %s31 = sadd.s32 0, 0
      %p32 = scmp.lt.s32.totalorder %s31, 0
      %s33 = scalar_select %p32, %s31, 0
      %s34 = smul.u32 2, %s33
      %36 = vsyncadd [#allocation6], 0
      %s37 = smul.addr %s34, 8
      %s38 = scalar_lea.hbm %s1, %s37
      %s39 = sshll.u32 %s38, 4
      %s40 = int_to_ptr.hbm [resolvable:$true] %s39
      %s41 = sshll.u32 [#allocation5], 4
      %s42 = int_to_ptr.vmem [resolvable:$true] %s41
      %47 = dma.hbm_to_vmem [thread:$0]  %s40, 256, %s42, [#allocation6], 128, 128, 8
    $region9: #{tpu_custom_call.1} parent=1 // pred_fallthru
      _
    // Predicated region
    $region10: #{tpu_custom_call.1} parent=1 // pred_check
      _
    $region11: #{tpu_custom_call.1} parent=1 // pred_check_branch
      %49 = sbr.rel (0) target = $region13
    $region12: #{tpu_custom_call.1} parent=1 // pred_region
      %51 = dma.done [#allocation3], 256
    $region13: #{tpu_custom_call.1} parent=1 // pred_fallthru
      _
    // Predicated region
    $region14: #{tpu_custom_call.1} parent=1 // pred_check
      _
    $region15: #{tpu_custom_call.1} parent=1 // pred_check_branch
      %53 = sbr.rel (0) target = $region17
    $region16: #{tpu_custom_call.1} parent=1 // pred_region
      %55 = dma.done [#allocation6], 256
    $region17: #{tpu_custom_call.1} parent=1 // pred_fallthru
      _
    %s56 = sadd.s32 0, 0
    %p57 = scmp.lt.s32.totalorder %s56, 0
    %s58 = scalar_select %p57, %s56, 0
    %s59 = smul.u32 2, %s58
    %s60 = sadd.s32 0, 0
    %p61 = scmp.lt.s32.totalorder %s60, 0
    %s62 = scalar_select %p61, %s60, 0
    %s63 = smul.u32 2, %s62
    %p64 = scmp.eq.s32.totalorder 0, 0
    // Predicated region
    $region18: #{tpu_custom_call.1} parent=1 // pred_check
      %p65 = pneg %p64
    $region19: #{tpu_custom_call.1} parent=1 // pred_check_branch
      %67 = sbr.rel (%p65) target = $region21
    $region20: #{tpu_custom_call.1} parent=1 // pred_region
      %68 = vst [vmem:[#allocation7] sm:$0xff] 0.0
    $region21: #{tpu_custom_call.1} parent=1 // pred_fallthru
      _
    %v69 = vld [vmem:[#allocation2] sm:$0xff]
    %v70 = vld [vmem:[#allocation2 + $0x8] sm:$0xff]
    %v71 = vld [vmem:[#allocation5] sm:$0xff]
    %v72 = vld [vmem:[#allocation5 + $0x8] sm:$0xff]
    %v73 = vmul.f32 %v71, 0.9
    %v74 = vmul.f32 %v72, 0.9
    %v75 = vadd.f32 %v73, 0.05
    %v76 = vadd.f32 %v74, 0.05
    %v77 = vmax.f32 %v69, 0.0
    %v78 = vmax.f32 %v70, 0.0
    %v79 = vmul.f32 %v69, %v75
    %v80 = vmul.f32 %v70, %v76
    %v81 = vsub.f32 %v77, %v79
    %v82 = vsub.f32 %v78, %v80
    %v83 = vand.u32 2147483647, %v69
    %v84 = vand.u32 2147483647, %v70
    %v85 = vsub.f32 0.0, %v83
    %v86 = vsub.f32 0.0, %v84
    %v87 = vmul.f32 %v85, 1.442695
    %v88 = vpow.pop %v87
    %v89 = vmul.f32 %v86, 1.442695
    %v90 = vpow.pop %v89
    %v91 = vadd.f32 %v88, 1.0
    %v92 = vlog2.pop %v91
    %v93 = vmul.f32 %v92, 0.6931472
    %v94 = vmul.f32 -0.5, %v88
    %v95 = vadd.f32 %v94, 1.0
    %v96 = vmul.f32 %v95, %v88
    %v97 = vand.u32 2147483647, %v88
    %vm98 = vcmp.lt.f32.partialorder %v97, 0.0004427343
    %v99 = vsel %vm98, %v96, %v93
    %v100 = vadd.f32 %v90, 1.0
    %v101 = vlog2.pop %v100
    %v102 = vmul.f32 %v101, 0.6931472
    %v103 = vmul.f32 -0.5, %v90
    %v104 = vadd.f32 %v103, 1.0
    %v105 = vmul.f32 %v104, %v90
    %v106 = vand.u32 2147483647, %v90
    %vm107 = vcmp.lt.f32.partialorder %v106, 0.0004427343
    %v108 = vsel %vm107, %v105, %v102
    %v109 = vadd.f32 %v81, %v99
    %v110 = vadd.f32 %v82, %v108
    %v111 = vsub.f32 0.0, %v109
    %v112 = vsub.f32 0.0, %v110
    %v113 = vmul.f32 %v111, 1.442695
    %v114 = vpow.pop %v113
    %v115 = vmul.f32 %v112, 1.442695
    %v116 = vpow.pop %v115
    %v117 = vmin.f32 %v114, 1.0
    %v118 = vmin.f32 %v116, 1.0
    %v119 = vsub.f32 0.0, %v117
    %v120 = vsub.f32 0.0, %v118
    %v121 = vadd.f32 %v119, 1.0
    %v122 = vlog2.pop %v121
    %v123 = vmul.f32 %v122, 0.6931472
    %v124 = vmul.f32 -0.5, %v119
    %v125 = vadd.f32 %v124, 1.0
    %v126 = vmul.f32 %v125, %v119
    %v127 = vand.u32 2147483647, %v119
    %vm128 = vcmp.lt.f32.partialorder %v127, 0.0004427343
    %v129 = vsel %vm128, %v126, %v123
    %v130 = vadd.f32 %v120, 1.0
    %v131 = vlog2.pop %v130
    %v132 = vmul.f32 %v131, 0.6931472
    %v133 = vmul.f32 -0.5, %v120
    %v134 = vadd.f32 %v133, 1.0
    %v135 = vmul.f32 %v134, %v120
    %v136 = vand.u32 2147483647, %v120
    %vm137 = vcmp.lt.f32.partialorder %v136, 0.0004427343
    %v138 = vsel %vm137, %v135, %v132
    %v139 = vmul.f32 %v129, 0.1
    %v140 = vmul.f32 %v138, 0.1
    %v141 = vmul.f32 %v139, 1.442695
    %v142 = vpow.pop %v141
    %v143 = vmul.f32 %v140, 1.442695
    %v144 = vpow.pop %v143
    %v145 = vmul.f32 %v75, 0.5
    %v146 = vmul.f32 %v76, 0.5
    %v147 = vsub.f32 1.0, %v75
    %v148 = vsub.f32 1.0, %v76
    %v149 = vmul.f32 %v147, 0.5
    %v150 = vmul.f32 %v148, 0.5
    %v151 = vadd.f32 %v145, %v149
    %v152 = vadd.f32 %v146, %v150
    %v153 = vmul.f32 %v151, %v142
    %v154 = vmul.f32 %v152, %v144
    %v155 = vmul.f32 %v153, %v109
    %v156 = vmul.f32 %v154, %v110
    %s157 = sadd.s32 0, 0
    %s158 = smul.u32 %s157, 2048
    %s159 = sadd.s32 %s158, 2048
    %p160 = scmp.le.s32.totalorder %s159, 2048
    // Predicated region
    $region22: #{tpu_custom_call.1} parent=1 // pred_check
      %p161 = pneg %p160
    $region23: #{tpu_custom_call.1} parent=1 // pred_check_branch
      %163 = sbr.rel (%p161) target = $region25
    $region24: #{tpu_custom_call.1} parent=1 // pred_region
      %v164 = vld [vmem:[#allocation7] sm:$0xff]
      %v165 = vadd.f32 %v155, %v156
      %v166 = vadd.f32 %v164, %v165
      %167 = vst [vmem:[#allocation7] sm:$0xff] %v166
    $region25: #{tpu_custom_call.1} parent=1 // pred_fallthru
      _
    %p168 = scmp.gt.s32.totalorder %s159, 2048
    // Predicated region
    $region26: #{tpu_custom_call.1} parent=1 // pred_check
      %p169 = pneg %p168
    $region27: #{tpu_custom_call.1} parent=1 // pred_check_branch
      %171 = sbr.rel (%p169) target = $region29
    $region28: #{tpu_custom_call.1} parent=1 // pred_region
      %v172 = vlaneseq
      %v173 = vshrl.u32 %v172, 7
      %v174 = vadd.s32 %v173, 8
      %v175 = vlaneseq
      %v176 = vand.u32 %v175, 127
      %v177 = vmul.u32 %v173, 128
      %v178 = vmul.u32 %v174, 128
      %v179 = vstv %s158
      %v180 = vadd.s32 %v179, %v177
      %v181 = vadd.s32 %v179, %v178
      %v182 = vadd.s32 %v180, %v176
      %v183 = vadd.s32 %v181, %v176
      %vm184 = vcmp.lt.s32.totalorder %v182, 2048
      %vm185 = vcmp.lt.s32.totalorder %v183, 2048
      %v186 = vsel %vm184, %v155, 0.0
      %v187 = vsel %vm185, %v156, 0.0
      %v188 = vld [vmem:[#allocation7] sm:$0xff]
      %v189 = vadd.f32 %v186, %v187
      %v190 = vadd.f32 %v188, %v189
      %191 = vst [vmem:[#allocation7] sm:$0xff] %v190
    $region29: #{tpu_custom_call.1} parent=1 // pred_fallthru
      _
    // Predicated region
    $region30: #{tpu_custom_call.1} parent=1 // pred_check
      _
    $region31: #{tpu_custom_call.1} parent=1 // pred_check_branch
      %193 = sbr.rel (0) target = $region33
    $region32: #{tpu_custom_call.1} parent=1 // pred_region
      %195 = vsyncadd [#allocation4], 0
      %s197 = sshll.u32 [#allocation7], 4
      %s198 = int_to_ptr.vmem [resolvable:$true] %s197
      %s199 = sshll.u32 %s2, 4
      %s200 = int_to_ptr.hbm [resolvable:$true] %s199
      %202 = dma.vmem_to_hbm [thread:$0]  %s198, 128, %s200, [#allocation4]
    $region33: #{tpu_custom_call.1} parent=1 // pred_fallthru
      _
    // Predicated region
    $region34: #{tpu_custom_call.1} parent=1 // pred_check
      _
    $region35: #{tpu_custom_call.1} parent=1 // pred_check_branch
      %204 = sbr.rel (0) target = $region37
    $region36: #{tpu_custom_call.1} parent=1 // pred_region
      %206 = dma.done [#allocation4], 128
    $region37: #{tpu_custom_call.1} parent=1 // pred_fallthru
      _
    %207 = vsyncpa [#allocation3], 1
    %208 = vsyncpa [#allocation6], 1
    %209 = vsyncpa [#allocation4], 1

</llo_original>
